<compile_context>
chip_gen: v6e
topology: v6e:2x2x1
jax: 0.10.0
libtpu: 0.0.40
codegen_flags: <defaults>
</compile_context>

<pallas_src>
import functools

import jax
import jax.numpy as jnp
from jax.experimental import pallas as pl
from jax.experimental.pallas import tpu as pltpu


# -----------------------------------------------------------------------------
# Kernels
# -----------------------------------------------------------------------------
def _analytic_kernel(x_ref, p_ref, mean_ref, var_ref, *, inv_area):
    # x_ref: (rb, H*W) block of probabilities; p_ref: (H*W, Ho*Wo) 0/1 matrix.
    x = x_ref[...]
    p = p_ref[...]
    sx = jnp.dot(x, p, preferred_element_type=jnp.float32)        # window sums of x
    sxx = jnp.dot(x * x, p, preferred_element_type=jnp.float32)   # window sums of x^2
    px = sx * inv_area
    pxx = sxx * inv_area
    mean_ref[...] = (1.0 - 2.0 * px).astype(mean_ref.dtype)       # pool(1 - 2x)
    var_ref[...] = (4.0 * (px - pxx)).astype(var_ref.dtype)       # pool(1 - m^2)


def _sampling_kernel(x_ref, p_ref, out_ref, *, inv_area):
    s = jnp.dot(x_ref[...], p_ref[...], preferred_element_type=jnp.float32)
    out_ref[...] = (s * inv_area).astype(out_ref.dtype)


# -----------------------------------------------------------------------------
# Wrapper helpers
# -----------------------------------------------------------------------------
def _pool_matrix(Hc, Wc, kh, kw, dtype):
    """Static 0/1 window-selection matrix of shape (Hc*Wc, Ho*Wo)."""
    Ho, Wo = Hc // kh, Wc // kw
    hh = jnp.arange(Hc)
    ww = jnp.arange(Wc)
    col = ((hh[:, None] // kh) * Wo + (ww[None, :] // kw)).reshape(Hc * Wc)
    return (col[:, None] == jnp.arange(Ho * Wo)[None, :]).astype(dtype)


def _choose_row_block(nc, row_bytes, target_bytes=2 << 20):
    """Rows per grid step: multiple of 8, aiming for ~2 MiB input tiles."""
    rb = max(8, (target_bytes // max(row_bytes, 1)) // 8 * 8)
    rb = min(rb, 4096)
    nc8 = ((nc + 7) // 8) * 8
    return int(min(rb, nc8))


def bayes_avg_pool2d(x, kernel_size=2, mode="analytic"):
    """x: (N, C, H, W). Returns (mean, var) in 'analytic' mode, else pooled x."""
    if isinstance(kernel_size, (tuple, list)):
        kh, kw = int(kernel_size[0]), int(kernel_size[1])
    else:
        kh = kw = int(kernel_size)
    N, C, H, W = x.shape
    Ho, Wo = H // kh, W // kw              # floor, matches F.avg_pool2d (no pad)
    Hc, Wc = Ho * kh, Wo * kw
    if (Hc, Wc) != (H, W):                 # crop non-divisible borders
        x = x[:, :, :Hc, :Wc]

    NC = N * C
    HW = Hc * Wc
    HoWo = Ho * Wo
    x_flat = x.reshape(NC, HW)             # free reshape, lane-dense last dim

    # TODO(synk): for very large H*W a separable P_h / P_w factorization would
    # keep the pooling matrix and FLOPs small; the dense P is ideal at BNN
    # feature-map scales (<= 64x64).
    p = _pool_matrix(Hc, Wc, kh, kw, x.dtype)
    inv_area = 1.0 / float(kh * kw)
    xb = jnp.dtype(x.dtype).itemsize
    n_out = 2 if mode == "analytic" else 1

    rb = _choose_row_block(NC, HW * xb)

    def _vmem_need(r):
        return (2 * r * HW * xb                 # input tiles (double buffered)
                + 2 * HW * HoWo * xb            # pooling matrix
                + n_out * 2 * r * HoWo * xb     # output tiles (double buffered)
                + r * HW * 4                    # in-kernel x*x temporary (f32)
                + 2 * r * HoWo * 4              # f32 matmul accumulators
                + (2 << 20))                    # slack

    budget = 40 << 20
    while rb > 8 and _vmem_need(rb) > budget:
        rb = max(8, (rb // 2) // 8 * 8)

    nc_pad = -(-NC // rb) * rb
    if nc_pad != NC:
        x_flat = jnp.pad(x_flat, ((0, nc_pad - NC), (0, 0)))
    grid = (nc_pad // rb,)

    x_spec = pl.BlockSpec((rb, HW), lambda i: (i, 0))
    p_spec = pl.BlockSpec((HW, HoWo), lambda i: (0, 0))   # revisited -> fetched once
    o_spec = pl.BlockSpec((rb, HoWo), lambda i: (i, 0))

    cparams = pltpu.CompilerParams(
        dimension_semantics=("parallel",),
        vmem_limit_bytes=int(min(max(_vmem_need(rb), 32 << 20), 48 << 20)),
    )

    if mode == "analytic":
        kern = functools.partial(_analytic_kernel, inv_area=inv_area)
        mean_f, var_f = pl.pallas_call(
            kern,
            out_shape=(jax.ShapeDtypeStruct((nc_pad, HoWo), x.dtype),
                       jax.ShapeDtypeStruct((nc_pad, HoWo), x.dtype)),
            grid=grid,
            in_specs=[x_spec, p_spec],
            out_specs=(o_spec, o_spec),
            compiler_params=cparams,
        )(x_flat, p)
        mean = mean_f[:NC].reshape(N, C, Ho, Wo)
        var = var_f[:NC].reshape(N, C, Ho, Wo)
        return mean, var
    else:  # "sampling" or "MAP"
        kern = functools.partial(_sampling_kernel, inv_area=inv_area)
        out_f = pl.pallas_call(
            kern,
            out_shape=jax.ShapeDtypeStruct((nc_pad, HoWo), x.dtype),
            grid=grid,
            in_specs=[x_spec, p_spec],
            out_specs=o_spec,
            compiler_params=cparams,
        )(x_flat, p)
        return out_f[:NC].reshape(N, C, Ho, Wo)


# -----------------------------------------------------------------------------
# Pure-JAX references (match the PyTorch forward)
# -----------------------------------------------------------------------------
def _ref_pool(t, kh, kw):
    N, C, H, W = t.shape
    Ho, Wo = H // kh, W // kw
    t = t[:, :, :Ho * kh, :Wo * kw]
    return t.reshape(N, C, Ho, kh, Wo, kw).mean(axis=(3, 5))


def _reference_analytic(x, kernel_size=2):
    kh = kw = kernel_size
    m = 1.0 - 2.0 * x
    v = 1.0 - m * m
    return _ref_pool(m, kh, kw), _ref_pool(v, kh, kw)


if __name__ == "__main__":
    key = jax.random.PRNGKey(0)
    # Inputs after a sign/Bernoulli activation: probabilities in [0, 1].
    x = jax.random.uniform(key, (2, 4, 16, 16), dtype=jnp.float32)

    mean_out, var_out = bayes_avg_pool2d(x, kernel_size=2, mode="analytic")
    samp_out = bayes_avg_pool2d(x, kernel_size=2, mode="sampling")
    jax.block_until_ready((mean_out, var_out, samp_out))

    ref_mean, ref_var = _reference_analytic(x, kernel_size=2)
    ref_samp = _ref_pool(x, 2, 2)

    assert mean_out.shape == (2, 4, 8, 8) and var_out.shape == (2, 4, 8, 8)
    assert samp_out.shape == (2, 4, 8, 8)
    assert jnp.allclose(mean_out, ref_mean, atol=1e-5)
    assert jnp.allclose(var_out, ref_var, atol=1e-5)
    assert jnp.allclose(samp_out, ref_samp, atol=1e-5)

    print("KERNEL_OK")
</pallas_src>

<mosaic_0001>
module attributes {stable_mosaic.version = 11 : i64} {
  func.func @_analytic_kernel(%arg0: i32, %arg1: memref<8x256xf32, #tpu.memory_space<vmem>>, %arg2: memref<256x64xf32, #tpu.memory_space<vmem>>, %arg3: memref<8x64xf32, #tpu.memory_space<vmem>>, %arg4: memref<8x64xf32, #tpu.memory_space<vmem>>) attributes {dimension_semantics = [#tpu.dimension_semantics<parallel>], iteration_bounds = array<i64: 1>, scalar_prefetch = 0 : i64, scratch_operands = 0 : i64, tpu.core_type = #tpu.core_type<tc>, window_params = [{transform_indices = @transform_0, window_bounds = array<i64: 8, 256>}, {pipeline_mode = #tpu.pipeline_mode<synchronous>, transform_indices = @transform_1, window_bounds = array<i64: 256, 64>}, {transform_indices = @transform_2, window_bounds = array<i64: 8, 64>}, {transform_indices = @transform_3, window_bounds = array<i64: 8, 64>}]} {
    %c0 = arith.constant 0 : index
    %c0_0 = arith.constant 0 : index
    %0 = vector.load %arg1[%c0, %c0_0] : memref<8x256xf32, #tpu.memory_space<vmem>>, vector<8x256xf32>
    %c0_1 = arith.constant 0 : index
    %c0_2 = arith.constant 0 : index
    %1 = vector.load %arg2[%c0_1, %c0_2] : memref<256x64xf32, #tpu.memory_space<vmem>>, vector<256x64xf32>
    %cst = arith.constant dense<0.000000e+00> : vector<8x64xf32>
    %2 = tpu.matmul %0, %1, %cst {dimension_numbers = #tpu.dot_dimension_numbers<[1], [0], [0], [1], [0, 0, 1, 1], [], []>} : vector<8x256xf32>, vector<256x64xf32>, vector<8x64xf32> -> vector<8x64xf32>
    %3 = arith.mulf %0, %0 : vector<8x256xf32>
    %cst_3 = arith.constant dense<0.000000e+00> : vector<8x64xf32>
    %4 = tpu.matmul %3, %1, %cst_3 {dimension_numbers = #tpu.dot_dimension_numbers<[1], [0], [0], [1], [0, 0, 1, 1], [], []>} : vector<8x256xf32>, vector<256x64xf32>, vector<8x64xf32> -> vector<8x64xf32>
    %cst_4 = arith.constant 2.500000e-01 : f32
    %5 = vector.broadcast %cst_4 : f32 to vector<8x64xf32>
    %6 = arith.mulf %2, %5 : vector<8x64xf32>
    %cst_5 = arith.constant 2.500000e-01 : f32
    %7 = vector.broadcast %cst_5 : f32 to vector<8x64xf32>
    %8 = arith.mulf %4, %7 : vector<8x64xf32>
    %cst_6 = arith.constant 2.000000e+00 : f32
    %9 = vector.broadcast %cst_6 : f32 to vector<8x64xf32>
    %10 = arith.mulf %9, %6 : vector<8x64xf32>
    %cst_7 = arith.constant 1.000000e+00 : f32
    %11 = vector.broadcast %cst_7 : f32 to vector<8x64xf32>
    %12 = arith.subf %11, %10 : vector<8x64xf32>
    %c0_8 = arith.constant 0 : index
    %c0_9 = arith.constant 0 : index
    %13 = vector.load %arg3[%c0_8, %c0_9] : memref<8x64xf32, #tpu.memory_space<vmem>>, vector<8x64xf32>
    tpu.vector_store %arg3[%c0_8, %c0_9], %12 {strides = array<i32>} : memref<8x64xf32, #tpu.memory_space<vmem>>, vector<8x64xf32>,
    %14 = arith.subf %6, %8 : vector<8x64xf32>
    %cst_10 = arith.constant 4.000000e+00 : f32
    %15 = vector.broadcast %cst_10 : f32 to vector<8x64xf32>
    %16 = arith.mulf %15, %14 : vector<8x64xf32>
    %c0_11 = arith.constant 0 : index
    %c0_12 = arith.constant 0 : index
    %17 = vector.load %arg4[%c0_11, %c0_12] : memref<8x64xf32, #tpu.memory_space<vmem>>, vector<8x64xf32>
    tpu.vector_store %arg4[%c0_11, %c0_12], %16 {strides = array<i32>} : memref<8x64xf32, #tpu.memory_space<vmem>>, vector<8x64xf32>,
    return
  }
  func.func @transform_0(%arg0: i32) -> (i32, i32) {
    %c0_i32 = arith.constant 0 : i32
    %c0_i32_0 = arith.constant 0 : i32
    return %arg0, %c0_i32 : i32, i32
  }
  func.func @transform_1(%arg0: i32) -> (i32, i32) {
    %c0_i32 = arith.constant 0 : i32
    %c0_i32_0 = arith.constant 0 : i32
    %c0_i32_1 = arith.constant 0 : i32
    return %c0_i32, %c0_i32_0 : i32, i32
  }
  func.func @transform_2(%arg0: i32) -> (i32, i32) {
    %c0_i32 = arith.constant 0 : i32
    %c0_i32_0 = arith.constant 0 : i32
    return %arg0, %c0_i32 : i32, i32
  }
  func.func @transform_3(%arg0: i32) -> (i32, i32) {
    %c0_i32 = arith.constant 0 : i32
    %c0_i32_0 = arith.constant 0 : i32
    return %arg0, %c0_i32 : i32, i32
  }
}

</mosaic_0001>

<llo_original>
// kernel: tpu_custom_call.1
$region0: #{tpu_custom_call.1}
  #allocation0 [shape = 'u32[]', space=smem, size = 0x4, offset = 0x4, fixed_abs, tag = 'smem constant byte address 0x4 - core index']
  #allocation1 [shape = 'u32[144,128]{1,0:T(1,128)}', space=vmem, size = 0x12000, scoped, tag = 'internal scratch']
  %s0 = inlined_call_operand.vmem [shape: f32[8,256], index: 0, kind: input, shape index: {}]
  %s1 = inlined_call_operand.vmem [shape: f32[256,64], index: 1, kind: input, shape index: {}]
  %s2 = inlined_call_operand.hbm [shape: f32[8,64], index: 2, kind: output, shape index: {0}]
  %s3 = inlined_call_operand.hbm [shape: f32[8,64], index: 3, kind: output, shape index: {1}]
  %4 = xla_tuple %s2, %s3
  %s5 = sld [smem:[#allocation0]]
  $region26: #{tpu_custom_call.1} parent=0
    _
  %s7 = ssub.s32 1, %s5
  %s8 = scalar_select 0, %s7, %s5
  $region1: #{tpu_custom_call.1} parent=0
    #allocation2 [shape = 'u8[4096]{0}', space=vmem, size = 0x1000, scoped, tag = 'output window, operand 0, single buffered']
    #allocation3 [shape = 's32[1]{0}', space=sflag, size = 0x4, scoped, tag = 'scoped memory for tpu_custom_call.1']
    #allocation4 [shape = 'u8[4096]{0}', space=vmem, size = 0x1000, scoped, tag = 'output window, operand 1, single buffered']
    #allocation5 [shape = 's32[1]{0}', space=sflag, size = 0x4, scoped, tag = 'scoped memory for tpu_custom_call.1']
    %9 = vsyncpa [#allocation3], 0
    %10 = vsyncpa [#allocation5], 0
    // Predicated region
    $region2: #{tpu_custom_call.1} parent=1 // pred_check
      _
    $region3: #{tpu_custom_call.1} parent=1 // pred_check_branch
      %12 = sbr.rel (0) target = $region5
    $region4: #{tpu_custom_call.1} parent=1 // pred_region
      _
    $region5: #{tpu_custom_call.1} parent=1 // pred_fallthru
      _
    // Predicated region
    $region6: #{tpu_custom_call.1} parent=1 // pred_check
      _
    $region7: #{tpu_custom_call.1} parent=1 // pred_check_branch
      %14 = sbr.rel (0) target = $region9
    $region8: #{tpu_custom_call.1} parent=1 // pred_region
      _
    $region9: #{tpu_custom_call.1} parent=1 // pred_fallthru
      _
    %v15 = vld [vmem:[%s0] sm:$0xff]
    %v16 = vld [vmem:[%s0 + $0x8] sm:$0xff]
    %v17 = vld [vmem:[%s1] sm:$0xff]
    %v18 = vld [vmem:[%s1 + $0x8] sm:$0xff]
    %v19 = vld [vmem:[%s1 + $0x10] sm:$0xff]
    %v20 = vld [vmem:[%s1 + $0x18] sm:$0xff]
    %v21 = vld [vmem:[%s1 + $0x20] sm:$0xff]
    %v22 = vld [vmem:[%s1 + $0x28] sm:$0xff]
    %v23 = vld [vmem:[%s1 + $0x30] sm:$0xff]
    %v24 = vld [vmem:[%s1 + $0x38] sm:$0xff]
    %v25 = vld [vmem:[%s1 + $0x40] sm:$0xff]
    %v26 = vld [vmem:[%s1 + $0x48] sm:$0xff]
    %v27 = vld [vmem:[%s1 + $0x50] sm:$0xff]
    %v28 = vld [vmem:[%s1 + $0x58] sm:$0xff]
    %v29 = vld [vmem:[%s1 + $0x60] sm:$0xff]
    %v30 = vld [vmem:[%s1 + $0x68] sm:$0xff]
    %v31 = vld [vmem:[%s1 + $0x70] sm:$0xff]
    %v32 = vld [vmem:[%s1 + $0x78] sm:$0xff]
    %v33 = vld [vmem:[%s1 + $0x80] sm:$0xff]
    %v34 = vld [vmem:[%s1 + $0x88] sm:$0xff]
    %v35 = vld [vmem:[%s1 + $0x90] sm:$0xff]
    %v36 = vld [vmem:[%s1 + $0x98] sm:$0xff]
    %v37 = vld [vmem:[%s1 + $0xa0] sm:$0xff]
    %v38 = vld [vmem:[%s1 + $0xa8] sm:$0xff]
    %v39 = vld [vmem:[%s1 + $0xb0] sm:$0xff]
    %v40 = vld [vmem:[%s1 + $0xb8] sm:$0xff]
    %v41 = vld [vmem:[%s1 + $0xc0] sm:$0xff]
    %v42 = vld [vmem:[%s1 + $0xc8] sm:$0xff]
    %v43 = vld [vmem:[%s1 + $0xd0] sm:$0xff]
    %v44 = vld [vmem:[%s1 + $0xd8] sm:$0xff]
    %v45 = vld [vmem:[%s1 + $0xe0] sm:$0xff]
    %v46 = vld [vmem:[%s1 + $0xe8] sm:$0xff]
    %v47 = vld [vmem:[%s1 + $0xf0] sm:$0xff]
    %v48 = vld [vmem:[%s1 + $0xf8] sm:$0xff]
    %49 = vmatprep.subr.mxu0 0.0
    %50 = vmatpush1.msra.mxu0 %v32
    %51 = vmatprep.subr.mxu0 0.0
    %52 = vmatpush1.msra.mxu0 %v31
    %53 = vmatprep.subr.mxu0 0.0
    %54 = vmatpush1.msra.mxu0 %v30
    %55 = vmatprep.subr.mxu0 0.0
    %56 = vmatpush1.msra.mxu0 %v29
    %57 = vmatprep.subr.mxu0 0.0
    %58 = vmatpush1.msra.mxu0 %v28
    %59 = vmatprep.subr.mxu0 0.0
    %60 = vmatpush1.msra.mxu0 %v27
    %61 = vmatprep.subr.mxu0 0.0
    %62 = vmatpush1.msra.mxu0 %v26
    %63 = vmatprep.subr.mxu0 0.0
    %64 = vmatpush1.msra.mxu0 %v25
    %65 = vmatprep.subr.mxu0 0.0
    %66 = vmatpush1.msra.mxu0 %v24
    %67 = vmatprep.subr.mxu0 0.0
    %68 = vmatpush1.msra.mxu0 %v23
    %69 = vmatprep.subr.mxu0 0.0
    %70 = vmatpush1.msra.mxu0 %v22
    %71 = vmatprep.subr.mxu0 0.0
    %72 = vmatpush1.msra.mxu0 %v21
    %73 = vmatprep.subr.mxu0 0.0
    %74 = vmatpush1.msra.mxu0 %v20
    %75 = vmatprep.subr.mxu0 0.0
    %76 = vmatpush1.msra.mxu0 %v19
    %77 = vmatprep.subr.mxu0 0.0
    %78 = vmatpush1.msra.mxu0 %v18
    %79 = vmatprep.subr.mxu0 0.0
    %80 = vmatpush1.msra.mxu0 %v17
    %81 = vmatprep.subr.mxu0 0.0
    %82 = vmatpush2.msra.mxu0 %v48
    %83 = vmatprep.subr.mxu0 0.0
    %84 = vmatpush2.msra.mxu0 %v47
    %85 = vmatprep.subr.mxu0 0.0
    %86 = vmatpush2.msra.mxu0 %v46
    %87 = vmatprep.subr.mxu0 0.0
    %88 = vmatpush2.msra.mxu0 %v45
    %89 = vmatprep.subr.mxu0 0.0
    %90 = vmatpush2.msra.mxu0 %v44
    %91 = vmatprep.subr.mxu0 0.0
    %92 = vmatpush2.msra.mxu0 %v43
    %93 = vmatprep.subr.mxu0 0.0
    %94 = vmatpush2.msra.mxu0 %v42
    %95 = vmatprep.subr.mxu0 0.0
    %96 = vmatpush2.msra.mxu0 %v41
    %97 = vmatprep.subr.mxu0 0.0
    %98 = vmatpush2.msra.mxu0 %v40
    %99 = vmatprep.subr.mxu0 0.0
    %100 = vmatpush2.msra.mxu0 %v39
    %101 = vmatprep.subr.mxu0 0.0
    %102 = vmatpush2.msra.mxu0 %v38
    %103 = vmatprep.subr.mxu0 0.0
    %104 = vmatpush2.msra.mxu0 %v37
    %105 = vmatprep.subr.mxu0 0.0
    %106 = vmatpush2.msra.mxu0 %v36
    %107 = vmatprep.subr.mxu0 0.0
    %108 = vmatpush2.msra.mxu0 %v35
    %109 = vmatprep.subr.mxu0 0.0
    %110 = vmatpush2.msra.mxu0 %v34
    %111 = vmatprep.subr.mxu0 0.0
    %112 = vmatpush2.msra.mxu0 %v33
    %113 = vmatprep.mubr.f32.mxu0 %v16
    %114 = vmatmul.mubr.f32.gmra.mxu0 %v15
    %v115 = vpop.f32.mrf.mxu0
    %v116 = vadd.f32 0.0, %v115
    %v117 = vpop.f32.mrf.mxu0
    %118 = vdwg.mxu0
    %v119 = vmul.f32 %v15, %v15
    %v120 = vmul.f32 %v16, %v16
    %121 = vmatprep.subr.mxu0 0.0
    %122 = vmatpush1.msra.mxu0 %v32
    %123 = vmatprep.subr.mxu0 0.0
    %124 = vmatpush1.msra.mxu0 %v31
    %125 = vmatprep.subr.mxu0 0.0
    %126 = vmatpush1.msra.mxu0 %v30
    %127 = vmatprep.subr.mxu0 0.0
    %128 = vmatpush1.msra.mxu0 %v29
    %129 = vmatprep.subr.mxu0 0.0
    %130 = vmatpush1.msra.mxu0 %v28
    %131 = vmatprep.subr.mxu0 0.0
    %132 = vmatpush1.msra.mxu0 %v27
    %133 = vmatprep.subr.mxu0 0.0
    %134 = vmatpush1.msra.mxu0 %v26
    %135 = vmatprep.subr.mxu0 0.0
    %136 = vmatpush1.msra.mxu0 %v25
    %137 = vmatprep.subr.mxu0 0.0
    %138 = vmatpush1.msra.mxu0 %v24
    %139 = vmatprep.subr.mxu0 0.0
    %140 = vmatpush1.msra.mxu0 %v23
    %141 = vmatprep.subr.mxu0 0.0
    %142 = vmatpush1.msra.mxu0 %v22
    %143 = vmatprep.subr.mxu0 0.0
    %144 = vmatpush1.msra.mxu0 %v21
    %145 = vmatprep.subr.mxu0 0.0
    %146 = vmatpush1.msra.mxu0 %v20
    %147 = vmatprep.subr.mxu0 0.0
    %148 = vmatpush1.msra.mxu0 %v19
    %149 = vmatprep.subr.mxu0 0.0
    %150 = vmatpush1.msra.mxu0 %v18
    %151 = vmatprep.subr.mxu0 0.0
    %152 = vmatpush1.msra.mxu0 %v17
    %153 = vmatprep.subr.mxu0 0.0
    %154 = vmatpush2.msra.mxu0 %v48
    %155 = vmatprep.subr.mxu0 0.0
    %156 = vmatpush2.msra.mxu0 %v47
    %157 = vmatprep.subr.mxu0 0.0
    %158 = vmatpush2.msra.mxu0 %v46
    %159 = vmatprep.subr.mxu0 0.0
    %160 = vmatpush2.msra.mxu0 %v45
    %161 = vmatprep.subr.mxu0 0.0
    %162 = vmatpush2.msra.mxu0 %v44
    %163 = vmatprep.subr.mxu0 0.0
    %164 = vmatpush2.msra.mxu0 %v43
    %165 = vmatprep.subr.mxu0 0.0
    %166 = vmatpush2.msra.mxu0 %v42
    %167 = vmatprep.subr.mxu0 0.0
    %168 = vmatpush2.msra.mxu0 %v41
    %169 = vmatprep.subr.mxu0 0.0
    %170 = vmatpush2.msra.mxu0 %v40
    %171 = vmatprep.subr.mxu0 0.0
    %172 = vmatpush2.msra.mxu0 %v39
    %173 = vmatprep.subr.mxu0 0.0
    %174 = vmatpush2.msra.mxu0 %v38
    %175 = vmatprep.subr.mxu0 0.0
    %176 = vmatpush2.msra.mxu0 %v37
    %177 = vmatprep.subr.mxu0 0.0
    %178 = vmatpush2.msra.mxu0 %v36
    %179 = vmatprep.subr.mxu0 0.0
    %180 = vmatpush2.msra.mxu0 %v35
    %181 = vmatprep.subr.mxu0 0.0
    %182 = vmatpush2.msra.mxu0 %v34
    %183 = vmatprep.subr.mxu0 0.0
    %184 = vmatpush2.msra.mxu0 %v33
    %185 = vmatprep.mubr.f32.mxu0 %v120
    %186 = vmatmul.mubr.f32.gmra.mxu0 %v119
    %v187 = vpop.f32.mrf.mxu0
    %v188 = vadd.f32 0.0, %v187
    %v189 = vpop.f32.mrf.mxu0
    %190 = vdwg.mxu0
    %v191 = vmul.f32 %v116, 0.25
    %v192 = vmul.f32 %v188, 0.25
    %v193 = vmul.f32 %v191, 2.0
    %v194 = vsub.f32 1.0, %v193
    %vm195 = vcmask 523264
    %196 = vst.msk [vmem:[#allocation2] sm:$0xff] %vm195, %v194
    %v197 = vsub.f32 %v191, %v192
    %v198 = vmul.f32 %v197, 4.0
    %199 = vst.msk [vmem:[#allocation4] sm:$0xff] %vm195, %v198
    // Predicated region
    $region10: #{tpu_custom_call.1} parent=1 // pred_check
      _
    $region11: #{tpu_custom_call.1} parent=1 // pred_check_branch
      %201 = sbr.rel (0) target = $region13
    $region12: #{tpu_custom_call.1} parent=1 // pred_region
      %s203 = ssub.s32 128, 128
      %204 = vsyncadd [#allocation3], %s203
      %s206 = sshll.u32 [#allocation2], 4
      %s207 = int_to_ptr.vmem [resolvable:$true] %s206
      %209 = dma.vmem_to_hbm [thread:$0]  %s207, 128, %s2, [#allocation3]
    $region13: #{tpu_custom_call.1} parent=1 // pred_fallthru
      _
    // Predicated region
    $region14: #{tpu_custom_call.1} parent=1 // pred_check
      _
    $region15: #{tpu_custom_call.1} parent=1 // pred_check_branch
      %211 = sbr.rel (0) target = $region17
    $region16: #{tpu_custom_call.1} parent=1 // pred_region
      %s213 = ssub.s32 128, 128
      %214 = vsyncadd [#allocation5], %s213
      %s216 = sshll.u32 [#allocation4], 4
      %s217 = int_to_ptr.vmem [resolvable:$true] %s216
      %219 = dma.vmem_to_hbm [thread:$0]  %s217, 128, %s3, [#allocation5]
    $region17: #{tpu_custom_call.1} parent=1 // pred_fallthru
      _
    // Predicated region
    $region18: #{tpu_custom_call.1} parent=1 // pred_check
      _
    $region19: #{tpu_custom_call.1} parent=1 // pred_check_branch
      %221 = sbr.rel (0) target = $region21
    $region20: #{tpu_custom_call.1} parent=1 // pred_region
      %222 = dma.done [#allocation3], 128
    $region21: #{tpu_custom_call.1} parent=1 // pred_fallthru
      _
    // Predicated region
    $region22: #{tpu_custom_call.1} parent=1 // pred_check
      _
    $region23: #{tpu_custom_call.1} parent=1 // pred_check_branch
      %224 = sbr.rel (0) target = $region25
    $region24: #{tpu_custom_call.1} parent=1 // pred_region
      %225 = dma.done [#allocation5], 128
    $region25: #{tpu_custom_call.1} parent=1 // pred_fallthru
      _
    %226 = vsyncpa [#allocation3], 1
    %227 = vsyncpa [#allocation5], 1

</llo_original>
